<compile_context>
chip_gen: v7x
topology: tpu7x:2x2x1
jax: 0.10.0
libtpu: 0.0.40
codegen_flags: <defaults>
</compile_context>

<pallas_src>
import functools

import jax
import jax.numpy as jnp
from jax import lax
from jax.experimental import pallas as pl
from jax.experimental.pallas import tpu as pltpu

EPS = 1e-5  # PyTorch nn.LayerNorm default

_STATIC_UNROLL_MAX_P = 128  # fully unroll the per-p loop below this


def _decoder_kernel(stats_ref, par_ref, x_ref, o_ref, *, P):
    # stats_ref: SMEM (3,)    = [Var(W), 2*Cov(W,b), Var(b)+eps]
    # par_ref:   SMEM (3, P)  rows = [scale, shift, beta]
    # x_ref:     VMEM (1, R, t_l)
    # o_ref:     VMEM (1, P, R, t_l)
    x = x_ref[0]                                   # (R, t_l) f32, dense sublanes
    var_w = stats_ref[0]
    cov2 = stats_ref[1]
    var_b_eps = stats_ref[2]

    # invstd = rsqrt(x^2*Var(W) + 2x*Cov + Var(b) + eps)   (EUP slot)
    invstd = lax.rsqrt((x * var_w + cov2) * x + var_b_eps)  # (R, t_l)
    xs = invstd * x                                         # (R, t_l)

    if P <= _STATIC_UNROLL_MAX_P:
        # Static unroll: constant SMEM indices, constant store offsets.
        for p in range(P):
            sc = par_ref[0, p]
            sh = par_ref[1, p]
            be = par_ref[2, p]
            o_ref[0, p] = xs * sc + invstd * sh + be
    else:
        # Large pred_len: dynamic per-p loop (SMEM scalar reads are cheap).
        def body(p, carry):
            sc = par_ref[0, p]
            sh = par_ref[1, p]
            be = par_ref[2, p]
            o_ref[0, pl.ds(p, 1)] = (xs * sc + invstd * sh + be)[None]
            return carry

        lax.fori_loop(0, P, body, None, unroll=8)


def _pick_lane_tile(nd_r, P, R, B, vmem_budget=20 * 1024 * 1024):
    """Lane tile (128-multiple or the full extent) + number of lane tiles."""
    # Double-buffered per-step VMEM for x block + out block, per unit of t_l.
    per_lane_bytes = 2 * 4 * R * (P + 1)
    cap = max(128, (vmem_budget // per_lane_bytes) // 128 * 128)

    if nd_r <= cap:
        t_l = nd_r            # full extent: always layout-legal
    else:
        t_l = cap             # multiple of 128; grid uses cdiv (padded tail ok)

    n_tiles = pl.cdiv(nd_r, t_l)

    # v7x megacore: make sure there are >= 2 grid steps along a parallel axis.
    if B * n_tiles < 2 and nd_r > 128:
        half = ((nd_r + 1) // 2 + 127) // 128 * 128
        t_l = max(128, min(half, t_l))
        n_tiles = pl.cdiv(nd_r, t_l)

    return t_l, n_tiles


def decoder_forward(x, w, b, gamma, beta):
    """x: [B, 1, N, D] float32 -> [B, P, N, D] float32."""
    B, C, N, D = x.shape
    assert C == 1
    P = int(w.shape[0])
    ND = N * D

    f32 = jnp.float32
    w = w.astype(f32)
    b = b.astype(f32)
    gamma = gamma.astype(f32)
    beta = beta.astype(f32)

    # Closed-form LayerNorm statistics of y[p] = x*W[p] + b[p] (biased, 1/P).
    m_w = jnp.mean(w)
    m_b = jnp.mean(b)
    dw = w - m_w
    db = b - m_b
    var_w = jnp.mean(dw * dw)
    cov = jnp.mean(dw * db)
    var_b = jnp.mean(db * db)

    stats = jnp.stack([var_w, 2.0 * cov, var_b + EPS])          # (3,)   SMEM
    params = jnp.stack([gamma * dw, gamma * db, beta], axis=0)  # (3, P) SMEM

    # Sublane factor: put as much of ND on the sublane axis as divides evenly.
    R = 8 if ND % 8 == 0 else 4 if ND % 4 == 0 else 2 if ND % 2 == 0 else 1
    ND_R = ND // R

    x3 = x.astype(f32).reshape(B, R, ND_R)   # free contiguous view

    t_l, n_tiles = _pick_lane_tile(ND_R, P, R, B)
    grid = (B, n_tiles)

    kernel = functools.partial(_decoder_kernel, P=P)

    out = pl.pallas_call(
        kernel,
        out_shape=jax.ShapeDtypeStruct((B, P, R, ND_R), f32),
        grid_spec=pltpu.PrefetchScalarGridSpec(
            num_scalar_prefetch=0,
            grid=grid,
            in_specs=[
                pl.BlockSpec(memory_space=pltpu.MemorySpace.SMEM),   # stats
                pl.BlockSpec(memory_space=pltpu.MemorySpace.SMEM),   # params
                pl.BlockSpec((1, R, t_l), lambda i, l: (i, 0, l)),   # x
            ],
            out_specs=pl.BlockSpec((1, P, R, t_l), lambda i, l: (i, 0, 0, l)),
        ),
        compiler_params=pltpu.CompilerParams(
            dimension_semantics=("parallel", "parallel"),
            vmem_limit_bytes=32 * 1024 * 1024,
        ),
        cost_estimate=pl.CostEstimate(
            flops=int(B * ND * (4 * P + 5)),
            transcendentals=int(B * ND),
            bytes_accessed=int(4 * B * ND * (P + 1)),
        ),
    )(stats, params, x3)                                             # (B,P,R,ND_R)

    # Free contiguous view back to [B, P, N, D] — no transpose, no extra copy.
    return out.reshape(B, P, N, D)


def decoder_reference(x, w, b, gamma, beta):
    """Pure-JAX reference mirroring the PyTorch module."""
    xp = jnp.transpose(x, (0, 2, 3, 1))                 # [B, N, D, 1]
    y = xp * w[None, None, None, :] + b                 # [B, N, D, P]
    mean = jnp.mean(y, axis=-1, keepdims=True)
    var = jnp.mean((y - mean) ** 2, axis=-1, keepdims=True)
    y = (y - mean) / jnp.sqrt(var + EPS) * gamma + beta
    return jnp.transpose(y, (0, 3, 1, 2))               # [B, P, N, D]


if __name__ == "__main__":
    B, N, D = 2, 8, 16
    pred_len = 8
    mid_dim = 32  # unused by the forward pass (matches the PyTorch module)

    key = jax.random.PRNGKey(0)
    kx, kw, kb = jax.random.split(key, 3)

    x = jax.random.normal(kx, (B, 1, N, D), dtype=jnp.float32)

    # Deterministic parameter init (Linear(1, P) weight/bias ~ U(-1, 1), the
    # kaiming bound for fan_in=1; LayerNorm gamma=1, beta=0).
    w = jax.random.uniform(kw, (pred_len,), jnp.float32, -1.0, 1.0)
    b = jax.random.uniform(kb, (pred_len,), jnp.float32, -1.0, 1.0)
    gamma = jnp.ones((pred_len,), jnp.float32)
    beta = jnp.zeros((pred_len,), jnp.float32)

    out = decoder_forward(x, w, b, gamma, beta)
    out = jax.block_until_ready(out)

    ref = decoder_reference(x, w, b, gamma, beta)
    assert out.shape == (B, pred_len, N, D), out.shape
    assert jnp.allclose(out, ref, atol=1e-4, rtol=1e-4), "mismatch vs reference"

    print("KERNEL_OK")
</pallas_src>

<mosaic_0001>
module attributes {stable_mosaic.version = 11 : i64} {
  func.func @_decoder_kernel(%arg0: i32, %arg1: i32, %arg2: memref<3xf32, #tpu.memory_space<smem>>, %arg3: memref<3x8xf32, #tpu.memory_space<smem>>, %arg4: memref<1x8x16xf32, #tpu.memory_space<vmem>>, %arg5: memref<1x8x8x16xf32, #tpu.memory_space<vmem>>) attributes {dimension_semantics = [#tpu.dimension_semantics<parallel>, #tpu.dimension_semantics<parallel>], iteration_bounds = array<i64: 2, 1>, scalar_prefetch = 0 : i64, scratch_operands = 0 : i64, tpu.core_type = #tpu.core_type<tc>, window_params = [{transform_indices = @transform_0, window_bounds = array<i64: 3>}, {transform_indices = @transform_1, window_bounds = array<i64: 3, 8>}, {transform_indices = @transform_2, window_bounds = array<i64: 1, 8, 16>}, {transform_indices = @transform_3, window_bounds = array<i64: 1, 8, 8, 16>}]} {
    %c0 = arith.constant 0 : index
    %c0_0 = arith.constant 0 : index
    %c0_1 = arith.constant 0 : index
    %0 = vector.load %arg4[%c0, %c0_0, %c0_1] : memref<1x8x16xf32, #tpu.memory_space<vmem>>, vector<1x8x16xf32>
    %1 = vector.shape_cast %0 : vector<1x8x16xf32> to vector<8x16xf32>
    %c0_2 = arith.constant 0 : index
    %2 = memref.load %arg2[%c0_2] : memref<3xf32, #tpu.memory_space<smem>>
    %c1 = arith.constant 1 : index
    %3 = memref.load %arg2[%c1] : memref<3xf32, #tpu.memory_space<smem>>
    %c2 = arith.constant 2 : index
    %4 = memref.load %arg2[%c2] : memref<3xf32, #tpu.memory_space<smem>>
    %5 = vector.broadcast %2 : f32 to vector<8x16xf32>
    %6 = arith.mulf %1, %5 : vector<8x16xf32>
    %7 = vector.broadcast %3 : f32 to vector<8x16xf32>
    %8 = arith.addf %6, %7 : vector<8x16xf32>
    %9 = arith.mulf %8, %1 : vector<8x16xf32>
    %10 = vector.broadcast %4 : f32 to vector<8x16xf32>
    %11 = arith.addf %9, %10 : vector<8x16xf32>
    %12 = math.rsqrt %11 : vector<8x16xf32>
    %13 = arith.mulf %12, %1 : vector<8x16xf32>
    %c0_3 = arith.constant 0 : index
    %c0_4 = arith.constant 0 : index
    %14 = memref.load %arg3[%c0_3, %c0_4] : memref<3x8xf32, #tpu.memory_space<smem>>
    %c1_5 = arith.constant 1 : index
    %c0_6 = arith.constant 0 : index
    %15 = memref.load %arg3[%c1_5, %c0_6] : memref<3x8xf32, #tpu.memory_space<smem>>
    %c2_7 = arith.constant 2 : index
    %c0_8 = arith.constant 0 : index
    %16 = memref.load %arg3[%c2_7, %c0_8] : memref<3x8xf32, #tpu.memory_space<smem>>
    %17 = vector.broadcast %14 : f32 to vector<8x16xf32>
    %18 = arith.mulf %13, %17 : vector<8x16xf32>
    %19 = vector.broadcast %15 : f32 to vector<8x16xf32>
    %20 = arith.mulf %12, %19 : vector<8x16xf32>
    %21 = arith.addf %18, %20 : vector<8x16xf32>
    %22 = vector.broadcast %16 : f32 to vector<8x16xf32>
    %23 = arith.addf %21, %22 : vector<8x16xf32>
    %c0_9 = arith.constant 0 : index
    %c0_10 = arith.constant 0 : index
    %c0_11 = arith.constant 0 : index
    %c0_12 = arith.constant 0 : index
    %24 = vector.load %arg5[%c0_9, %c0_10, %c0_11, %c0_12] : memref<1x8x8x16xf32, #tpu.memory_space<vmem>>, vector<1x1x8x16xf32>
    %25 = vector.shape_cast %24 : vector<1x1x8x16xf32> to vector<8x16xf32>
    %26 = vector.shape_cast %23 : vector<8x16xf32> to vector<1x1x8x16xf32>
    tpu.vector_store %arg5[%c0_9, %c0_10, %c0_11, %c0_12], %26 {strides = array<i32>} : memref<1x8x8x16xf32, #tpu.memory_space<vmem>>, vector<1x1x8x16xf32>,
    %c0_13 = arith.constant 0 : index
    %c1_14 = arith.constant 1 : index
    %27 = memref.load %arg3[%c0_13, %c1_14] : memref<3x8xf32, #tpu.memory_space<smem>>
    %c1_15 = arith.constant 1 : index
    %c1_16 = arith.constant 1 : index
    %28 = memref.load %arg3[%c1_15, %c1_16] : memref<3x8xf32, #tpu.memory_space<smem>>
    %c2_17 = arith.constant 2 : index
    %c1_18 = arith.constant 1 : index
    %29 = memref.load %arg3[%c2_17, %c1_18] : memref<3x8xf32, #tpu.memory_space<smem>>
    %30 = vector.broadcast %27 : f32 to vector<8x16xf32>
    %31 = arith.mulf %13, %30 : vector<8x16xf32>
    %32 = vector.broadcast %28 : f32 to vector<8x16xf32>
    %33 = arith.mulf %12, %32 : vector<8x16xf32>
    %34 = arith.addf %31, %33 : vector<8x16xf32>
    %35 = vector.broadcast %29 : f32 to vector<8x16xf32>
    %36 = arith.addf %34, %35 : vector<8x16xf32>
    %c0_19 = arith.constant 0 : index
    %c1_20 = arith.constant 1 : index
    %c0_21 = arith.constant 0 : index
    %c0_22 = arith.constant 0 : index
    %37 = vector.load %arg5[%c0_19, %c1_20, %c0_21, %c0_22] : memref<1x8x8x16xf32, #tpu.memory_space<vmem>>, vector<1x1x8x16xf32>
    %38 = vector.shape_cast %37 : vector<1x1x8x16xf32> to vector<8x16xf32>
    %39 = vector.shape_cast %36 : vector<8x16xf32> to vector<1x1x8x16xf32>
    tpu.vector_store %arg5[%c0_19, %c1_20, %c0_21, %c0_22], %39 {strides = array<i32>} : memref<1x8x8x16xf32, #tpu.memory_space<vmem>>, vector<1x1x8x16xf32>,
    %c0_23 = arith.constant 0 : index
    %c2_24 = arith.constant 2 : index
    %40 = memref.load %arg3[%c0_23, %c2_24] : memref<3x8xf32, #tpu.memory_space<smem>>
    %c1_25 = arith.constant 1 : index
    %c2_26 = arith.constant 2 : index
    %41 = memref.load %arg3[%c1_25, %c2_26] : memref<3x8xf32, #tpu.memory_space<smem>>
    %c2_27 = arith.constant 2 : index
    %c2_28 = arith.constant 2 : index
    %42 = memref.load %arg3[%c2_27, %c2_28] : memref<3x8xf32, #tpu.memory_space<smem>>
    %43 = vector.broadcast %40 : f32 to vector<8x16xf32>
    %44 = arith.mulf %13, %43 : vector<8x16xf32>
    %45 = vector.broadcast %41 : f32 to vector<8x16xf32>
    %46 = arith.mulf %12, %45 : vector<8x16xf32>
    %47 = arith.addf %44, %46 : vector<8x16xf32>
    %48 = vector.broadcast %42 : f32 to vector<8x16xf32>
    %49 = arith.addf %47, %48 : vector<8x16xf32>
    %c0_29 = arith.constant 0 : index
    %c2_30 = arith.constant 2 : index
    %c0_31 = arith.constant 0 : index
    %c0_32 = arith.constant 0 : index
    %50 = vector.load %arg5[%c0_29, %c2_30, %c0_31, %c0_32] : memref<1x8x8x16xf32, #tpu.memory_space<vmem>>, vector<1x1x8x16xf32>
    %51 = vector.shape_cast %50 : vector<1x1x8x16xf32> to vector<8x16xf32>
    %52 = vector.shape_cast %49 : vector<8x16xf32> to vector<1x1x8x16xf32>
    tpu.vector_store %arg5[%c0_29, %c2_30, %c0_31, %c0_32], %52 {strides = array<i32>} : memref<1x8x8x16xf32, #tpu.memory_space<vmem>>, vector<1x1x8x16xf32>,
    %c0_33 = arith.constant 0 : index
    %c3 = arith.constant 3 : index
    %53 = memref.load %arg3[%c0_33, %c3] : memref<3x8xf32, #tpu.memory_space<smem>>
    %c1_34 = arith.constant 1 : index
    %c3_35 = arith.constant 3 : index
    %54 = memref.load %arg3[%c1_34, %c3_35] : memref<3x8xf32, #tpu.memory_space<smem>>
    %c2_36 = arith.constant 2 : index
    %c3_37 = arith.constant 3 : index
    %55 = memref.load %arg3[%c2_36, %c3_37] : memref<3x8xf32, #tpu.memory_space<smem>>
    %56 = vector.broadcast %53 : f32 to vector<8x16xf32>
    %57 = arith.mulf %13, %56 : vector<8x16xf32>
    %58 = vector.broadcast %54 : f32 to vector<8x16xf32>
    %59 = arith.mulf %12, %58 : vector<8x16xf32>
    %60 = arith.addf %57, %59 : vector<8x16xf32>
    %61 = vector.broadcast %55 : f32 to vector<8x16xf32>
    %62 = arith.addf %60, %61 : vector<8x16xf32>
    %c0_38 = arith.constant 0 : index
    %c3_39 = arith.constant 3 : index
    %c0_40 = arith.constant 0 : index
    %c0_41 = arith.constant 0 : index
    %63 = vector.load %arg5[%c0_38, %c3_39, %c0_40, %c0_41] : memref<1x8x8x16xf32, #tpu.memory_space<vmem>>, vector<1x1x8x16xf32>
    %64 = vector.shape_cast %63 : vector<1x1x8x16xf32> to vector<8x16xf32>
    %65 = vector.shape_cast %62 : vector<8x16xf32> to vector<1x1x8x16xf32>
    tpu.vector_store %arg5[%c0_38, %c3_39, %c0_40, %c0_41], %65 {strides = array<i32>} : memref<1x8x8x16xf32, #tpu.memory_space<vmem>>, vector<1x1x8x16xf32>,
    %c0_42 = arith.constant 0 : index
    %c4 = arith.constant 4 : index
    %66 = memref.load %arg3[%c0_42, %c4] : memref<3x8xf32, #tpu.memory_space<smem>>
    %c1_43 = arith.constant 1 : index
    %c4_44 = arith.constant 4 : index
    %67 = memref.load %arg3[%c1_43, %c4_44] : memref<3x8xf32, #tpu.memory_space<smem>>
    %c2_45 = arith.constant 2 : index
    %c4_46 = arith.constant 4 : index
    %68 = memref.load %arg3[%c2_45, %c4_46] : memref<3x8xf32, #tpu.memory_space<smem>>
    %69 = vector.broadcast %66 : f32 to vector<8x16xf32>
    %70 = arith.mulf %13, %69 : vector<8x16xf32>
    %71 = vector.broadcast %67 : f32 to vector<8x16xf32>
    %72 = arith.mulf %12, %71 : vector<8x16xf32>
    %73 = arith.addf %70, %72 : vector<8x16xf32>
    %74 = vector.broadcast %68 : f32 to vector<8x16xf32>
    %75 = arith.addf %73, %74 : vector<8x16xf32>
    %c0_47 = arith.constant 0 : index
    %c4_48 = arith.constant 4 : index
    %c0_49 = arith.constant 0 : index
    %c0_50 = arith.constant 0 : index
    %76 = vector.load %arg5[%c0_47, %c4_48, %c0_49, %c0_50] : memref<1x8x8x16xf32, #tpu.memory_space<vmem>>, vector<1x1x8x16xf32>
    %77 = vector.shape_cast %76 : vector<1x1x8x16xf32> to vector<8x16xf32>
    %78 = vector.shape_cast %75 : vector<8x16xf32> to vector<1x1x8x16xf32>
    tpu.vector_store %arg5[%c0_47, %c4_48, %c0_49, %c0_50], %78 {strides = array<i32>} : memref<1x8x8x16xf32, #tpu.memory_space<vmem>>, vector<1x1x8x16xf32>,
    %c0_51 = arith.constant 0 : index
    %c5 = arith.constant 5 : index
    %79 = memref.load %arg3[%c0_51, %c5] : memref<3x8xf32, #tpu.memory_space<smem>>
    %c1_52 = arith.constant 1 : index
    %c5_53 = arith.constant 5 : index
    %80 = memref.load %arg3[%c1_52, %c5_53] : memref<3x8xf32, #tpu.memory_space<smem>>
    %c2_54 = arith.constant 2 : index
    %c5_55 = arith.constant 5 : index
    %81 = memref.load %arg3[%c2_54, %c5_55] : memref<3x8xf32, #tpu.memory_space<smem>>
    %82 = vector.broadcast %79 : f32 to vector<8x16xf32>
    %83 = arith.mulf %13, %82 : vector<8x16xf32>
    %84 = vector.broadcast %80 : f32 to vector<8x16xf32>
    %85 = arith.mulf %12, %84 : vector<8x16xf32>
    %86 = arith.addf %83, %85 : vector<8x16xf32>
    %87 = vector.broadcast %81 : f32 to vector<8x16xf32>
    %88 = arith.addf %86, %87 : vector<8x16xf32>
    %c0_56 = arith.constant 0 : index
    %c5_57 = arith.constant 5 : index
    %c0_58 = arith.constant 0 : index
    %c0_59 = arith.constant 0 : index
    %89 = vector.load %arg5[%c0_56, %c5_57, %c0_58, %c0_59] : memref<1x8x8x16xf32, #tpu.memory_space<vmem>>, vector<1x1x8x16xf32>
    %90 = vector.shape_cast %89 : vector<1x1x8x16xf32> to vector<8x16xf32>
    %91 = vector.shape_cast %88 : vector<8x16xf32> to vector<1x1x8x16xf32>
    tpu.vector_store %arg5[%c0_56, %c5_57, %c0_58, %c0_59], %91 {strides = array<i32>} : memref<1x8x8x16xf32, #tpu.memory_space<vmem>>, vector<1x1x8x16xf32>,
    %c0_60 = arith.constant 0 : index
    %c6 = arith.constant 6 : index
    %92 = memref.load %arg3[%c0_60, %c6] : memref<3x8xf32, #tpu.memory_space<smem>>
    %c1_61 = arith.constant 1 : index
    %c6_62 = arith.constant 6 : index
    %93 = memref.load %arg3[%c1_61, %c6_62] : memref<3x8xf32, #tpu.memory_space<smem>>
    %c2_63 = arith.constant 2 : index
    %c6_64 = arith.constant 6 : index
    %94 = memref.load %arg3[%c2_63, %c6_64] : memref<3x8xf32, #tpu.memory_space<smem>>
    %95 = vector.broadcast %92 : f32 to vector<8x16xf32>
    %96 = arith.mulf %13, %95 : vector<8x16xf32>
    %97 = vector.broadcast %93 : f32 to vector<8x16xf32>
    %98 = arith.mulf %12, %97 : vector<8x16xf32>
    %99 = arith.addf %96, %98 : vector<8x16xf32>
    %100 = vector.broadcast %94 : f32 to vector<8x16xf32>
    %101 = arith.addf %99, %100 : vector<8x16xf32>
    %c0_65 = arith.constant 0 : index
    %c6_66 = arith.constant 6 : index
    %c0_67 = arith.constant 0 : index
    %c0_68 = arith.constant 0 : index
    %102 = vector.load %arg5[%c0_65, %c6_66, %c0_67, %c0_68] : memref<1x8x8x16xf32, #tpu.memory_space<vmem>>, vector<1x1x8x16xf32>
    %103 = vector.shape_cast %102 : vector<1x1x8x16xf32> to vector<8x16xf32>
    %104 = vector.shape_cast %101 : vector<8x16xf32> to vector<1x1x8x16xf32>
    tpu.vector_store %arg5[%c0_65, %c6_66, %c0_67, %c0_68], %104 {strides = array<i32>} : memref<1x8x8x16xf32, #tpu.memory_space<vmem>>, vector<1x1x8x16xf32>,
    %c0_69 = arith.constant 0 : index
    %c7 = arith.constant 7 : index
    %105 = memref.load %arg3[%c0_69, %c7] : memref<3x8xf32, #tpu.memory_space<smem>>
    %c1_70 = arith.constant 1 : index
    %c7_71 = arith.constant 7 : index
    %106 = memref.load %arg3[%c1_70, %c7_71] : memref<3x8xf32, #tpu.memory_space<smem>>
    %c2_72 = arith.constant 2 : index
    %c7_73 = arith.constant 7 : index
    %107 = memref.load %arg3[%c2_72, %c7_73] : memref<3x8xf32, #tpu.memory_space<smem>>
    %108 = vector.broadcast %105 : f32 to vector<8x16xf32>
    %109 = arith.mulf %13, %108 : vector<8x16xf32>
    %110 = vector.broadcast %106 : f32 to vector<8x16xf32>
    %111 = arith.mulf %12, %110 : vector<8x16xf32>
    %112 = arith.addf %109, %111 : vector<8x16xf32>
    %113 = vector.broadcast %107 : f32 to vector<8x16xf32>
    %114 = arith.addf %112, %113 : vector<8x16xf32>
    %c0_74 = arith.constant 0 : index
    %c7_75 = arith.constant 7 : index
    %c0_76 = arith.constant 0 : index
    %c0_77 = arith.constant 0 : index
    %115 = vector.load %arg5[%c0_74, %c7_75, %c0_76, %c0_77] : memref<1x8x8x16xf32, #tpu.memory_space<vmem>>, vector<1x1x8x16xf32>
    %116 = vector.shape_cast %115 : vector<1x1x8x16xf32> to vector<8x16xf32>
    %117 = vector.shape_cast %114 : vector<8x16xf32> to vector<1x1x8x16xf32>
    tpu.vector_store %arg5[%c0_74, %c7_75, %c0_76, %c0_77], %117 {strides = array<i32>} : memref<1x8x8x16xf32, #tpu.memory_space<vmem>>, vector<1x1x8x16xf32>,
    return
  }
  func.func @transform_0(%arg0: i32, %arg1: i32) -> i32 {
    %c0_i32 = arith.constant 0 : i32
    %c0_i32_0 = arith.constant 0 : i32
    return %c0_i32 : i32
  }
  func.func @transform_1(%arg0: i32, %arg1: i32) -> (i32, i32) {
    %c0_i32 = arith.constant 0 : i32
    %c0_i32_0 = arith.constant 0 : i32
    %c0_i32_1 = arith.constant 0 : i32
    return %c0_i32, %c0_i32_0 : i32, i32
  }
  func.func @transform_2(%arg0: i32, %arg1: i32) -> (i32, i32, i32) {
    %c0_i32 = arith.constant 0 : i32
    %c0_i32_0 = arith.constant 0 : i32
    return %arg0, %c0_i32, %arg1 : i32, i32, i32
  }
  func.func @transform_3(%arg0: i32, %arg1: i32) -> (i32, i32, i32, i32) {
    %c0_i32 = arith.constant 0 : i32
    %c0_i32_0 = arith.constant 0 : i32
    %c0_i32_1 = arith.constant 0 : i32
    return %arg0, %c0_i32, %c0_i32_0, %arg1 : i32, i32, i32, i32
  }
}

</mosaic_0001>

<llo_original>
// kernel: tpu_custom_call.1
$region0: #{tpu_custom_call.1}
  #allocation0 [shape = 'u32[]', space=smem, size = 0x4, offset = 0x4, fixed_abs, tag = 'smem constant byte address 0x4 - core index']
  #allocation1 [shape = 'u32[144,128]{1,0:T(1,128)}', space=vmem, size = 0x12000, scoped, tag = 'internal scratch']
  %s0 = inlined_call_operand.hbm [shape: f32[3], index: 0, kind: input, shape index: {}]
  %s1 = inlined_call_operand.hbm [shape: f32[3,8], index: 1, kind: input, shape index: {}]
  %s2 = inlined_call_operand.hbm [shape: f32[2,8,16], index: 2, kind: input, shape index: {}]
  %s3 = inlined_call_operand.hbm [shape: f32[2,8,8,16], index: 3, kind: output, shape index: {}]
  %s4 = sld [smem:[#allocation0]]
  $region57: #{tpu_custom_call.1} parent=0
    _
  %s6 = ssub.s32 1, %s4
  %s7 = scalar_select 0, %s6, %s4
  $region1: #{tpu_custom_call.1} parent=0
    #allocation2 [shape = 'u8[512]{0}', space=smem, size = 0x200, scoped, tag = 'input window, operand 0, single buffered']
    #allocation3 [shape = 's32[2]{0}', space=sflag, size = 0x8, scoped, tag = 'scoped memory for tpu_custom_call.1']
    #allocation4 [shape = 's32[2]{0}', space=sflag, size = 0x8, scoped, tag = 'scoped memory for tpu_custom_call.1']
    #allocation5 [shape = 's32[2]{0}', space=sflag, size = 0x8, scoped, tag = 'scoped memory for tpu_custom_call.1']
    #allocation6 [shape = 'u8[2048]{0}', space=smem, size = 0x800, scoped, tag = 'input window, operand 1, single buffered']
    #allocation7 [shape = 's32[1]{0}', space=sflag, size = 0x4, scoped, tag = 'scoped memory for tpu_custom_call.1']
    #allocation8 [shape = 'u8[8192]{0}', space=vmem, size = 0x2000, scoped, tag = 'input window, operand 2']
    #allocation9 [shape = 'u8[65536]{0}', space=vmem, size = 0x10000, scoped, tag = 'output window, operand 0']
    %8 = vsyncpa [#allocation5], 0
    %9 = vsyncpa [#allocation7], 0
    %10 = vsyncpa [#allocation3], 0
    %s11 = scalar_lea.sflag [#allocation3], 1
    %12 = vsyncpa %s11, 0
    %13 = vsyncpa [#allocation4], 0
    %s14 = scalar_lea.sflag [#allocation4], 1
    %15 = vsyncpa %s14, 0
    loop: start=0, step=1, limit=4
    $region2: #{tpu_custom_call.1} parent=1 // loop_pre_header
      _
    $region3: #{tpu_custom_call.1} parent=1 // loop_header
      %s17 = sphi 0, %s21
      %p18 = scmp.ge.s32.totalorder %s17, 4
      %s24 = sphi 0, %s36
      %s25 = sphi 0, %s32
      %s26 = sphi 0, %s24
      %s27 = sphi 0, %s25
      %s28 = sphi 0, %s26
      %s29 = sphi 0, %s27
      %s37 = sphi 0, %s37
      %s39 = sphi 0, %s37
      %s40 = sphi 0, %s39
      %s54 = sphi 0, %s40
      %s58 = sphi 0, %s58
      %s60 = sphi 0, %s58
      %s61 = sphi 0, %s60
      %s75 = sphi 0, %s61
      %s83 = sphi 0, %s85
      %s86 = sphi 0, %s83
      %s87 = sphi 0, %s86
      %s103 = sphi 0, %s87
      %s111 = sphi 0, %s113
      %s114 = sphi 0, %s111
      %s115 = sphi 0, %s114
      %s131 = sphi 0, %s115
    $region4: #{tpu_custom_call.1} parent=1 // loop_header_branch
      %20 = sbr.rel (%p18) target = $region8
    $region5: #{tpu_custom_call.1} parent=1 // loop_body
      %s22 = ssub.s32 %s17, 1
      %s23 = ssub.s32 %s17, 2
      %s30 = sadd.s32 1, %s25
      %p31 = scmp.ge.s32.totalorder %s30, 1
      %s32 = scalar_select %p31, 0, %s30
      %s33 = sadd.s32 1, %s24
      %s34 = scalar_select %p31, %s33, %s24
      %p35 = scmp.ge.s32.totalorder %s34, 2
      %s36 = scalar_select %p35, 0, %s34
      %s38 = sadd.s32 %s37, 1
      %p41 = scmp.eq.s32.totalorder %s17, 1
      %p42 = scmp.ne.s32.totalorder %s37, %s39
      %p43 = scmp.eq.s32.totalorder %s17, 0
      %p44 = por %p42, %p43
      %p45 = scmp.ne.s32.totalorder %s37, %s39
      %p46 = scmp.eq.s32.totalorder %s22, 1
      %p47 = por %p45, %p46
      %p48 = scmp.ne.s32.totalorder %s39, %s40
      %p49 = scmp.eq.s32.totalorder %s22, 0
      %p50 = por %p48, %p49
      %p51 = scmp.ne.s32.totalorder %s39, %s40
      %p52 = scmp.eq.s32.totalorder %s23, 1
      %p53 = por %p51, %p52
      %p55 = scmp.ne.s32.totalorder %s40, %s54
      %p56 = scmp.eq.s32.totalorder %s23, 0
      %p57 = por %p55, %p56
      %s59 = sadd.s32 %s58, 1
      %p62 = scmp.eq.s32.totalorder %s17, 1
      %p63 = scmp.ne.s32.totalorder %s58, %s60
      %p64 = scmp.eq.s32.totalorder %s17, 0
      %p65 = por %p63, %p64
      %p66 = scmp.ne.s32.totalorder %s58, %s60
      %p67 = scmp.eq.s32.totalorder %s22, 1
      %p68 = por %p66, %p67
      %p69 = scmp.ne.s32.totalorder %s60, %s61
      %p70 = scmp.eq.s32.totalorder %s22, 0
      %p71 = por %p69, %p70
      %p72 = scmp.ne.s32.totalorder %s60, %s61
      %p73 = scmp.eq.s32.totalorder %s23, 1
      %p74 = por %p72, %p73
      %p76 = scmp.ne.s32.totalorder %s61, %s75
      %p77 = scmp.eq.s32.totalorder %s23, 0
      %p78 = por %p76, %p77
      %s79 = ssub.s32 %s24, %s36
      %s80 = ssub.s32 %s25, %s32
      %s81 = sor.u32 %s79, %s80
      %p82 = scmp.eq.s32.totalorder %s81, 0
      %s84 = sadd.s32 %s83, 1
      %s85 = scalar_select %p82, %s83, %s84
      %p88 = pneg %p82
      %p89 = scmp.eq.s32.totalorder %s17, 1
      %p90 = por %p88, %p89
      %p91 = scmp.ne.s32.totalorder %s83, %s86
      %p92 = scmp.eq.s32.totalorder %s17, 0
      %p93 = por %p91, %p92
      %p94 = scmp.ne.s32.totalorder %s83, %s86
      %p95 = scmp.eq.s32.totalorder %s22, 1
      %p96 = por %p94, %p95
      %p97 = scmp.ne.s32.totalorder %s86, %s87
      %p98 = scmp.eq.s32.totalorder %s22, 0
      %p99 = por %p97, %p98
      %p100 = scmp.ne.s32.totalorder %s86, %s87
      %p101 = scmp.eq.s32.totalorder %s23, 1
      %p102 = por %p100, %p101
      %p104 = scmp.ne.s32.totalorder %s87, %s103
      %p105 = scmp.eq.s32.totalorder %s23, 0
      %p106 = por %p104, %p105
      %s107 = ssub.s32 %s24, %s36
      %s108 = ssub.s32 %s25, %s32
      %s109 = sor.u32 %s107, %s108
      %p110 = scmp.eq.s32.totalorder %s109, 0
      %s112 = sadd.s32 %s111, 1
      %s113 = scalar_select %p110, %s111, %s112
      %p116 = pneg %p110
      %p117 = scmp.eq.s32.totalorder %s17, 1
      %p118 = por %p116, %p117
      %p119 = scmp.ne.s32.totalorder %s111, %s114
      %p120 = scmp.eq.s32.totalorder %s17, 0
      %p121 = por %p119, %p120
      %p122 = scmp.ne.s32.totalorder %s111, %s114
      %p123 = scmp.eq.s32.totalorder %s22, 1
      %p124 = por %p122, %p123
      %p125 = scmp.ne.s32.totalorder %s114, %s115
      %p126 = scmp.eq.s32.totalorder %s22, 0
      %p127 = por %p125, %p126
      %p128 = scmp.ne.s32.totalorder %s114, %s115
      %p129 = scmp.eq.s32.totalorder %s23, 1
      %p130 = por %p128, %p129
      %p132 = scmp.ne.s32.totalorder %s115, %s131
      %p133 = scmp.eq.s32.totalorder %s23, 0
      %p134 = por %p132, %p133
      %p135 = scmp.le.s32.totalorder 1, %s17
      %p136 = scmp.lt.s32.totalorder %s17, 3
      %p137 = pnand %p135, %p136
      %p138 = pneg %p137
      // Predicated region
      $region9: #{tpu_custom_call.1} parent=5 // pred_check
        _
      $region10: #{tpu_custom_call.1} parent=5 // pred_check_branch
        %140 = sbr.rel (%p137) target = $region12
      $region11: #{tpu_custom_call.1} parent=5 // pred_region
        %s141 = ssub.s32 %s17, 1
        // Predicated region
        $region13: #{tpu_custom_call.1} parent=11 // pred_check
          %p142 = pneg %p50
        $region14: #{tpu_custom_call.1} parent=11 // pred_check_branch
          %144 = sbr.rel (%p142) target = $region16
        $region15: #{tpu_custom_call.1} parent=11 // pred_region
          %s146 = ssub.s32 16, 16
          %147 = vsyncadd [#allocation5], %s146
          %150 = dma.hbm_to_smem %s0, 16, [#allocation2], [#allocation5]
        $region16: #{tpu_custom_call.1} parent=11 // pred_fallthru
          _
        // Predicated region
        $region17: #{tpu_custom_call.1} parent=11 // pred_check
          %p151 = pneg %p71
        $region18: #{tpu_custom_call.1} parent=11 // pred_check_branch
          %153 = sbr.rel (%p151) target = $region20
        $region19: #{tpu_custom_call.1} parent=11 // pred_region
          %s155 = ssub.s32 64, 64
          %156 = vsyncadd [#allocation7], %s155
          %159 = dma.hbm_to_smem %s1, 64, [#allocation6], [#allocation7]
        $region20: #{tpu_custom_call.1} parent=11 // pred_fallthru
          _
      $region12: #{tpu_custom_call.1} parent=5 // pred_fallthru
        _
      %p160 = scmp.lt.s32.totalorder %s17, 2
      // Predicated region
      $region21: #{tpu_custom_call.1} parent=5 // pred_check
        %p161 = pneg %p160
      $region22: #{tpu_custom_call.1} parent=5 // pred_check_branch
        %163 = sbr.rel (%p161) target = $region24
      $region23: #{tpu_custom_call.1} parent=5 // pred_region
        // Predicated region
        $region25: #{tpu_custom_call.1} parent=23 // pred_check
          %p164 = pneg %p93
        $region26: #{tpu_custom_call.1} parent=23 // pred_check_branch
          %166 = sbr.rel (%p164) target = $region28
        $region27: #{tpu_custom_call.1} parent=23 // pred_region
          %s167 = sand.u32 %s83, 1
          %s168 = scalar_lea.sflag [#allocation3], %s167
          %s169 = sand.u32 %s83, 1
          %s170 = smul.addr %s169, 8
          %s171 = scalar_lea.vmem [#allocation8], %s170
          %s173 = ssub.s32 128, 128
          %174 = vsyncadd %s168, %s173
          %s175 = sadd.s32 %s25, %s24
          %s176 = smul.addr %s175, 128
          %s177 = scalar_lea.hbm %s2, %s176
          %s179 = sshll.u32 %s171, 4
          %s180 = int_to_ptr.vmem [resolvable:$true] %s179
          %182 = dma.hbm_to_vmem [thread:$0]  %s177, 128, %s180, %s168
        $region28: #{tpu_custom_call.1} parent=23 // pred_fallthru
          _
      $region24: #{tpu_custom_call.1} parent=5 // pred_fallthru
        _
      %p183 = scmp.le.s32.totalorder 1, %s17
      %p184 = scmp.lt.s32.totalorder %s17, 3
      %p185 = pnand %p183, %p184
      %p186 = pneg %p185
      // Predicated region
      $region29: #{tpu_custom_call.1} parent=5 // pred_check
        _
      $region30: #{tpu_custom_call.1} parent=5 // pred_check_branch
        %188 = sbr.rel (%p185) target = $region32
      $region31: #{tpu_custom_call.1} parent=5 // pred_region
        %s189 = ssub.s32 %s17, 1
        // Predicated region
        $region33: #{tpu_custom_call.1} parent=31 // pred_check
          %p190 = pneg %p50
        $region34: #{tpu_custom_call.1} parent=31 // pred_check_branch
          %192 = sbr.rel (%p190) target = $region36
        $region35: #{tpu_custom_call.1} parent=31 // pred_region
          %193 = dma.done [#allocation5], 16
        $region36: #{tpu_custom_call.1} parent=31 // pred_fallthru
          _
        // Predicated region
        $region37: #{tpu_custom_call.1} parent=31 // pred_check
          %p194 = pneg %p71
        $region38: #{tpu_custom_call.1} parent=31 // pred_check_branch
          %196 = sbr.rel (%p194) target = $region40
        $region39: #{tpu_custom_call.1} parent=31 // pred_region
          %197 = dma.done [#allocation7], 64
        $region40: #{tpu_custom_call.1} parent=31 // pred_fallthru
          _
        %s198 = sand.u32 %s86, 1
        %s199 = scalar_lea.sflag [#allocation3], %s198
        %s200 = sand.u32 %s86, 1
        %s201 = smul.addr %s200, 8
        %s202 = scalar_lea.vmem [#allocation8], %s201
        // Predicated region
        $region41: #{tpu_custom_call.1} parent=31 // pred_check
          %p203 = pneg %p99
        $region42: #{tpu_custom_call.1} parent=31 // pred_check_branch
          %205 = sbr.rel (%p203) target = $region44
        $region43: #{tpu_custom_call.1} parent=31 // pred_region
          %206 = dma.done %s199, 128
        $region44: #{tpu_custom_call.1} parent=31 // pred_fallthru
          _
        %207 = sfence
        %p208 = pneg %p50
        %p209 = pneg %p47
        %p210 = pneg %p71
        %p211 = pneg %p68
        %s212 = sand.u32 %s86, 1
        %s213 = scalar_lea.sflag [#allocation3], %s212
        %s214 = sand.u32 %s86, 1
        %s215 = smul.addr %s214, 8
        %s216 = scalar_lea.vmem [#allocation8], %s215
        %p217 = pneg %p99
        %p218 = pneg %p96
        %p219 = pneg %p127
        %p220 = pneg %p124
        %s221 = sand.u32 %s114, 1
        %s222 = scalar_lea.sflag [#allocation4], %s221
        %s223 = sand.u32 %s114, 1
        %s224 = smul.addr %s223, 64
        %s225 = scalar_lea.vmem [#allocation9], %s224
        %v226 = vld [vmem:[%s202] sm:$0xff]
        %s227 = sld [smem:[#allocation2]]
        %s228 = sld [smem:[#allocation2 + $0x1]]
        %s229 = sld [smem:[#allocation2 + $0x2]]
        %v230 = vstv %s227
        %v231 = vmul.f32 %v226, %v230
        %v232 = vstv %s228
        %v233 = vadd.f32 %v231, %v232
        %v234 = vmul.f32 %v233, %v226
        %v235 = vstv %s229
        %v236 = vadd.f32 %v234, %v235
        %v237 = vrsqrt.pop %v236
        %v238 = vmul.f32 %v237, %v226
        %s239 = sld [smem:[#allocation6]]
        %s240 = sld [smem:[#allocation6 + $0x80]]
        %s241 = sld [smem:[#allocation6 + $0x100]]
        %v242 = vstv %s239
        %v243 = vmul.f32 %v238, %v242
        %v244 = vstv %s240
        %v245 = vmul.f32 %v237, %v244
        %v246 = vadd.f32 %v243, %v245
        %v247 = vstv %s241
        %v248 = vadd.f32 %v246, %v247
        %vm249 = vcmask 130048
        %250 = vst.msk [vmem:[%s225] sm:$0xff] %vm249, %v248
        %s251 = sld [smem:[#allocation6 + $0x1]]
        %s252 = sld [smem:[#allocation6 + $0x81]]
        %s253 = sld [smem:[#allocation6 + $0x101]]
        %v254 = vstv %s251
        %v255 = vmul.f32 %v238, %v254
        %v256 = vstv %s252
        %v257 = vmul.f32 %v237, %v256
        %v258 = vadd.f32 %v255, %v257
        %v259 = vstv %s253
        %v260 = vadd.f32 %v258, %v259
        %s261 = scalar_lea.vmem %s225, 8 [#allocation9]
        %262 = vst.msk [vmem:[%s261] sm:$0xff] %vm249, %v260
        %s263 = sld [smem:[#allocation6 + $0x2]]
        %s264 = sld [smem:[#allocation6 + $0x82]]
        %s265 = sld [smem:[#allocation6 + $0x102]]
        %v266 = vstv %s263
        %v267 = vmul.f32 %v238, %v266
        %v268 = vstv %s264
        %v269 = vmul.f32 %v237, %v268
        %v270 = vadd.f32 %v267, %v269
        %v271 = vstv %s265
        %v272 = vadd.f32 %v270, %v271
        %s273 = scalar_lea.vmem %s225, 16 [#allocation9]
        %274 = vst.msk [vmem:[%s273] sm:$0xff] %vm249, %v272
        %s275 = sld [smem:[#allocation6 + $0x3]]
        %s276 = sld [smem:[#allocation6 + $0x83]]
        %s277 = sld [smem:[#allocation6 + $0x103]]
        %v278 = vstv %s275
        %v279 = vmul.f32 %v238, %v278
        %v280 = vstv %s276
        %v281 = vmul.f32 %v237, %v280
        %v282 = vadd.f32 %v279, %v281
        %v283 = vstv %s277
        %v284 = vadd.f32 %v282, %v283
        %s285 = scalar_lea.vmem %s225, 24 [#allocation9]
        %286 = vst.msk [vmem:[%s285] sm:$0xff] %vm249, %v284
        %s287 = sld [smem:[#allocation6 + $0x4]]
        %s288 = sld [smem:[#allocation6 + $0x84]]
        %s289 = sld [smem:[#allocation6 + $0x104]]
        %v290 = vstv %s287
        %v291 = vmul.f32 %v238, %v290
        %v292 = vstv %s288
        %v293 = vmul.f32 %v237, %v292
        %v294 = vadd.f32 %v291, %v293
        %v295 = vstv %s289
        %v296 = vadd.f32 %v294, %v295
        %s297 = scalar_lea.vmem %s225, 32 [#allocation9]
        %298 = vst.msk [vmem:[%s297] sm:$0xff] %vm249, %v296
        %s299 = sld [smem:[#allocation6 + $0x5]]
        %s300 = sld [smem:[#allocation6 + $0x85]]
        %s301 = sld [smem:[#allocation6 + $0x105]]
        %v302 = vstv %s299
        %v303 = vmul.f32 %v238, %v302
        %v304 = vstv %s300
        %v305 = vmul.f32 %v237, %v304
        %v306 = vadd.f32 %v303, %v305
        %v307 = vstv %s301
        %v308 = vadd.f32 %v306, %v307
        %s309 = scalar_lea.vmem %s225, 40 [#allocation9]
        %310 = vst.msk [vmem:[%s309] sm:$0xff] %vm249, %v308
        %s311 = sld [smem:[#allocation6 + $0x6]]
        %s312 = sld [smem:[#allocation6 + $0x86]]
        %s313 = sld [smem:[#allocation6 + $0x106]]
        %v314 = vstv %s311
        %v315 = vmul.f32 %v238, %v314
        %v316 = vstv %s312
        %v317 = vmul.f32 %v237, %v316
        %v318 = vadd.f32 %v315, %v317
        %v319 = vstv %s313
        %v320 = vadd.f32 %v318, %v319
        %s321 = scalar_lea.vmem %s225, 48 [#allocation9]
        %322 = vst.msk [vmem:[%s321] sm:$0xff] %vm249, %v320
        %s323 = sld [smem:[#allocation6 + $0x7]]
        %s324 = sld [smem:[#allocation6 + $0x87]]
        %s325 = sld [smem:[#allocation6 + $0x107]]
        %v326 = vstv %s323
        %v327 = vmul.f32 %v238, %v326
        %v328 = vstv %s324
        %v329 = vmul.f32 %v237, %v328
        %v330 = vadd.f32 %v327, %v329
        %v331 = vstv %s325
        %v332 = vadd.f32 %v330, %v331
        %s333 = scalar_lea.vmem %s225, 56 [#allocation9]
        %334 = vst.msk [vmem:[%s333] sm:$0xff] %vm249, %v332
        %s335 = sand.u32 %s114, 1
        %s336 = scalar_lea.sflag [#allocation4], %s335
        %s337 = sand.u32 %s114, 1
        %s338 = smul.addr %s337, 64
        %s339 = scalar_lea.vmem [#allocation9], %s338
        // Predicated region
        $region45: #{tpu_custom_call.1} parent=31 // pred_check
          %p340 = pneg %p124
        $region46: #{tpu_custom_call.1} parent=31 // pred_check_branch
          %342 = sbr.rel (%p340) target = $region48
        $region47: #{tpu_custom_call.1} parent=31 // pred_region
          %s344 = ssub.s32 1024, 1024
          %345 = vsyncadd %s336, %s344
          %s346 = smul.addr %s26, 8
          %s347 = sadd.s32 %s27, %s346
          %s348 = smul.addr %s347, 128
          %s349 = scalar_lea.hbm %s3, %s348
          %s350 = sshll.u32 %s339, 4
          %s351 = int_to_ptr.vmem [resolvable:$true] %s350
          %356 = dma.vmem_to_hbm [thread:$0]  %s351, 1024, %s349, %s336, 128, 128, 8
        $region48: #{tpu_custom_call.1} parent=31 // pred_fallthru
          _
      $region32: #{tpu_custom_call.1} parent=5 // pred_fallthru
        _
      %p357 = scmp.le.s32.totalorder 2, %s17
      // Predicated region
      $region49: #{tpu_custom_call.1} parent=5 // pred_check
        %p358 = pneg %p357
      $region50: #{tpu_custom_call.1} parent=5 // pred_check_branch
        %360 = sbr.rel (%p358) target = $region52
      $region51: #{tpu_custom_call.1} parent=5 // pred_region
        %s361 = ssub.s32 %s17, 2
        // Predicated region
        $region53: #{tpu_custom_call.1} parent=51 // pred_check
          %p362 = pneg %p130
        $region54: #{tpu_custom_call.1} parent=51 // pred_check_branch
          %364 = sbr.rel (%p362) target = $region56
        $region55: #{tpu_custom_call.1} parent=51 // pred_region
          %s365 = sand.u32 %s115, 1
          %s366 = scalar_lea.sflag [#allocation4], %s365
          %s367 = sand.u32 %s115, 1
          %s368 = smul.addr %s367, 64
          %s369 = scalar_lea.vmem [#allocation9], %s368
          %370 = dma.done %s366, 1024
        $region56: #{tpu_custom_call.1} parent=51 // pred_fallthru
          _
      $region52: #{tpu_custom_call.1} parent=5 // pred_fallthru
        _
    $region6: #{tpu_custom_call.1} parent=1 // loop_footer
      %s21 = sadd.s32 1, %s17
    $region7: #{tpu_custom_call.1} parent=1 // loop_footer_branch
      %16 = sbr.rel target = $region3
    $region8: #{tpu_custom_call.1} parent=1 // loop_exit
      _
    %371 = vsyncpa [#allocation3], 1
    %s372 = scalar_lea.sflag [#allocation3], 1
    %373 = vsyncpa %s372, 1
    %374 = vsyncpa [#allocation4], 1
    %s375 = scalar_lea.sflag [#allocation4], 1
    %376 = vsyncpa %s375, 1
    %377 = vsyncpa [#allocation5], 1
    %s378 = scalar_lea.sflag [#allocation5], 1
    %379 = vsyncpa %s378, 1
    %380 = vsyncpa [#allocation7], 1

</llo_original>
